<compile_context>
chip_gen: v7x
topology: tpu7x:2x2x1
jax: 0.10.0
libtpu: 0.0.40
codegen_flags: <defaults>
</compile_context>

<pallas_src>
import math
import functools

import jax
import jax.numpy as jnp
from jax.experimental import pallas as pl
from jax.experimental.pallas import tpu as pltpu


def _bernstein_kernel(y_ref, a_ref, inv_span_ref, ct_ref, dt_ref,
                      out_ref, logd_ref, *, degree):
    """Lane-dense Bernstein transform.

    y_ref        : (D, TN)      samples on lanes, variables on sublanes
    a_ref        : (D, 1)       lower polynomial range per variable
    inv_span_ref : (D, 1)       1 / (b - a) per variable
    ct_ref       : (M+1, D, 1)  C(M,k) * theta_r[k]
    dt_ref       : (M,   D, 1)  M * C(M-1,k) * (theta_r[k+1]-theta_r[k]) / (b-a)
    """
    M = degree
    y = y_ref[...]                      # (D, TN)
    a = a_ref[...]                      # (D, 1)
    inv_span = inv_span_ref[...]        # (D, 1)
    ct = ct_ref[...]                    # hoisted: single load, static slices below
    dt = dt_ref[...]

    ys = (y - a) * inv_span             # scaled to [0, 1]; reciprocal precomputed
    u = 1.0 - ys

    # Shared Horner-style Bernstein recurrence:
    #   A_j = u * A_{j-1} + ct[j] * ys^j   ->  A_M   = h(y)
    #   B_j = u * B_{j-1} + dt[j] * ys^j   ->  B_{M-1} = h'(y)
    out = ct[0]                         # (D, 1), broadcasts along lanes on first use
    dv = dt[0]
    ypow = ys                           # ys^1
    for j in range(1, M):
        out = u * out + ct[j] * ypow
        dv = u * dv + dt[j] * ypow
        ypow = ypow * ys
    out = u * out + ct[M] * ypow        # final degree-M step (forward only)

    out_ref[...] = jnp.broadcast_to(out, y.shape).astype(out_ref.dtype)
    # NOTE: log assumes h'(y) > 0, which holds for in-range y with the monotone
    # restriction (same assumption as the PyTorch module).
    logd_ref[...] = jnp.log(jnp.broadcast_to(dv, y.shape)).astype(logd_ref.dtype)


def restrict_params_monotone(theta_raw):
    """Monotonically-increasing restriction: theta_0, theta_0 + cumsum(exp(theta_1:))."""
    widths = jnp.exp(theta_raw[1:])
    return jnp.concatenate(
        [theta_raw[:1], theta_raw[:1] + jnp.cumsum(widths, axis=0)], axis=0)


def bernstein_transform(y, theta_restricted, poly_range, degree, block_n=1024):
    """Runs the Bernstein transformation hot path as a Pallas kernel.

    y:                (N, D) float32
    theta_restricted: (degree+1, D) float32 (already monotone-restricted)
    poly_range:       (2, D) float32  [lower; upper] per variable
    """
    assert degree >= 1
    N, D = y.shape
    M = degree

    y = y.astype(jnp.float32)
    theta_restricted = theta_restricted.astype(jnp.float32)
    poly_range = poly_range.astype(jnp.float32)

    a = poly_range[0]                                   # (D,)
    b = poly_range[1]                                   # (D,)
    inv_span = 1.0 / (b - a)                            # (D,)

    # Fold all per-k constants into tiny per-variable arrays (host side).
    comb_m = jnp.asarray([math.comb(M, k) for k in range(M + 1)], jnp.float32)
    comb_m1 = jnp.asarray([math.comb(M - 1, k) for k in range(M)], jnp.float32)
    ct = (comb_m[:, None] * theta_restricted)[:, :, None]               # (M+1, D, 1)
    dtheta = theta_restricted[1:] - theta_restricted[:-1]               # (M, D)
    dt = (float(M) * comb_m1[:, None] * dtheta * inv_span[None, :])[:, :, None]

    # Lane-dense layout: samples on lanes.
    y_t = y.T                                           # (D, N)

    # Tile the lane axis; pad N up to a lane-aligned block size.
    assert block_n % 128 == 0
    if N >= block_n:
        blk = block_n
    else:
        blk = max(128, -(-N // 128) * 128)              # single lane-aligned block
    n_pad = -(-N // blk) * blk
    if n_pad != N:
        mid = (0.5 * (a + b))[:, None]                  # in-range padding -> finite log
        y_t = jnp.concatenate(
            [y_t, jnp.broadcast_to(mid, (D, n_pad - N)).astype(y_t.dtype)], axis=1)

    a_col = a[:, None]                                  # (D, 1)
    inv_col = inv_span[:, None]                         # (D, 1)

    kernel = functools.partial(_bernstein_kernel, degree=M)

    out_t, logd_t = pl.pallas_call(
        kernel,
        out_shape=(
            jax.ShapeDtypeStruct((D, n_pad), jnp.float32),
            jax.ShapeDtypeStruct((D, n_pad), jnp.float32),
        ),
        grid_spec=pltpu.PrefetchScalarGridSpec(
            num_scalar_prefetch=0,
            grid=(n_pad // blk,),
            in_specs=[
                pl.BlockSpec((D, blk), lambda i: (0, i)),        # y tile (lane-dense)
                pl.BlockSpec((D, 1), lambda i: (0, 0)),          # a
                pl.BlockSpec((D, 1), lambda i: (0, 0)),          # 1/(b-a)
                pl.BlockSpec((M + 1, D, 1), lambda i: (0, 0, 0)),  # folded forward coefs
                pl.BlockSpec((M, D, 1), lambda i: (0, 0, 0)),      # folded derivative coefs
            ],
            out_specs=[
                pl.BlockSpec((D, blk), lambda i: (0, i)),
                pl.BlockSpec((D, blk), lambda i: (0, i)),
            ],
        ),
        compiler_params=pltpu.CompilerParams(
            dimension_semantics=("parallel",)),          # shards grid across TCs on v7x
    )(y_t, a_col, inv_col, ct, dt)

    out = out_t[:, :N].T
    log_d = logd_t[:, :N].T
    return out, log_d


def multivariate_transformation_model_forward(y, theta_raw, poly_range, degree,
                                              train=True):
    theta_r = restrict_params_monotone(theta_raw)        # tiny param transform (glue)
    out, log_d = bernstein_transform(y, theta_r, poly_range, degree)
    if train:
        return out, log_d, 0, 0, 0, 0
    return out


def _reference(y, theta_raw, poly_range, degree):
    """Pure-JAX reference (direct Bernstein form) for a sanity check."""
    theta = restrict_params_monotone(theta_raw)
    a, b = poly_range[0], poly_range[1]
    ys = (y - a) / (b - a)
    M = degree
    out = jnp.zeros_like(ys)
    for k in range(M + 1):
        out = out + math.comb(M, k) * ys ** k * (1 - ys) ** (M - k) * theta[k]
    deriv = jnp.zeros_like(ys)
    for k in range(M):
        deriv = deriv + (math.comb(M - 1, k) * ys ** k * (1 - ys) ** (M - 1 - k)
                         * (theta[k + 1] - theta[k]))
    deriv = deriv * (M / (b - a))
    return out, jnp.log(deriv)


if __name__ == "__main__":
    # Small shapes consistent with the module:
    #   number_variables = 3, degree_transformations = 10, batch N = 64
    number_variables = 3
    degree = 10
    N = 64

    key = jax.random.PRNGKey(0)
    k_y, k_theta = jax.random.split(key)

    # polynomial_range of shape (2, 1), torch .repeat(1, 3) -> (2, 3)
    poly_range_base = jnp.array([[-5.0], [5.0]], dtype=jnp.float32)
    poly_range = jnp.tile(poly_range_base, (1, number_variables))

    # data inside the polynomial range
    y = jax.random.uniform(k_y, (N, number_variables),
                           minval=-4.0, maxval=4.0, dtype=jnp.float32)

    # deterministic raw Bernstein parameters (degree+1, number_variables)
    theta_raw = 0.1 * jax.random.normal(
        k_theta, (degree + 1, number_variables), dtype=jnp.float32)

    out, log_d, *_rest = multivariate_transformation_model_forward(
        y, theta_raw, poly_range, degree, train=True)
    jax.block_until_ready((out, log_d))

    ref_out, ref_logd = _reference(y, theta_raw, poly_range, degree)
    assert jnp.allclose(out, ref_out, atol=2e-4, rtol=2e-4)
    assert jnp.allclose(log_d, ref_logd, atol=2e-4, rtol=2e-4)

    print("KERNEL_OK")
</pallas_src>

<mosaic_0001>
module attributes {stable_mosaic.version = 11 : i64} {
  func.func @_bernstein_kernel(%arg0: i32, %arg1: memref<3x128xf32, #tpu.memory_space<vmem>>, %arg2: memref<3x1xf32, #tpu.memory_space<vmem>>, %arg3: memref<3x1xf32, #tpu.memory_space<vmem>>, %arg4: memref<11x3x1xf32, #tpu.memory_space<vmem>>, %arg5: memref<10x3x1xf32, #tpu.memory_space<vmem>>, %arg6: memref<3x128xf32, #tpu.memory_space<vmem>>, %arg7: memref<3x128xf32, #tpu.memory_space<vmem>>) attributes {dimension_semantics = [#tpu.dimension_semantics<parallel>], iteration_bounds = array<i64: 1>, scalar_prefetch = 0 : i64, scratch_operands = 0 : i64, tpu.core_type = #tpu.core_type<tc>, window_params = [{transform_indices = @transform_0, window_bounds = array<i64: 3, 128>}, {pipeline_mode = #tpu.pipeline_mode<synchronous>, transform_indices = @transform_1, window_bounds = array<i64: 3, 1>}, {pipeline_mode = #tpu.pipeline_mode<synchronous>, transform_indices = @transform_2, window_bounds = array<i64: 3, 1>}, {pipeline_mode = #tpu.pipeline_mode<synchronous>, transform_indices = @transform_3, window_bounds = array<i64: 11, 3, 1>}, {pipeline_mode = #tpu.pipeline_mode<synchronous>, transform_indices = @transform_4, window_bounds = array<i64: 10, 3, 1>}, {transform_indices = @transform_5, window_bounds = array<i64: 3, 128>}, {transform_indices = @transform_6, window_bounds = array<i64: 3, 128>}]} {
    %c0 = arith.constant 0 : index
    %c0_0 = arith.constant 0 : index
    %0 = vector.load %arg1[%c0, %c0_0] : memref<3x128xf32, #tpu.memory_space<vmem>>, vector<3x128xf32>
    %c0_1 = arith.constant 0 : index
    %c0_2 = arith.constant 0 : index
    %1 = vector.load %arg2[%c0_1, %c0_2] : memref<3x1xf32, #tpu.memory_space<vmem>>, vector<3x1xf32>
    %c0_3 = arith.constant 0 : index
    %c0_4 = arith.constant 0 : index
    %2 = vector.load %arg3[%c0_3, %c0_4] : memref<3x1xf32, #tpu.memory_space<vmem>>, vector<3x1xf32>
    %c0_5 = arith.constant 0 : index
    %c0_6 = arith.constant 0 : index
    %c0_7 = arith.constant 0 : index
    %3 = vector.load %arg4[%c0_5, %c0_6, %c0_7] : memref<11x3x1xf32, #tpu.memory_space<vmem>>, vector<11x3x1xf32>
    %c0_8 = arith.constant 0 : index
    %c0_9 = arith.constant 0 : index
    %c0_10 = arith.constant 0 : index
    %4 = vector.load %arg5[%c0_8, %c0_9, %c0_10] : memref<10x3x1xf32, #tpu.memory_space<vmem>>, vector<10x3x1xf32>
    %5 = vector.broadcast %1 : vector<3x1xf32> to vector<3x128xf32>
    %6 = arith.subf %0, %5 : vector<3x128xf32>
    %7 = vector.broadcast %2 : vector<3x1xf32> to vector<3x128xf32>
    %8 = arith.mulf %6, %7 : vector<3x128xf32>
    %cst = arith.constant 1.000000e+00 : f32
    %9 = vector.broadcast %cst : f32 to vector<3x128xf32>
    %10 = arith.subf %9, %8 : vector<3x128xf32>
    %11 = vector.extract_strided_slice %3 {offsets = [0, 0, 0], sizes = [1, 3, 1], strides = [1, 1, 1]} : vector<11x3x1xf32> to vector<1x3x1xf32>
    %12 = vector.shape_cast %11 : vector<1x3x1xf32> to vector<3x1xf32>
    %13 = vector.extract_strided_slice %4 {offsets = [0, 0, 0], sizes = [1, 3, 1], strides = [1, 1, 1]} : vector<10x3x1xf32> to vector<1x3x1xf32>
    %14 = vector.shape_cast %13 : vector<1x3x1xf32> to vector<3x1xf32>
    %15 = vector.broadcast %12 : vector<3x1xf32> to vector<3x128xf32>
    %16 = arith.mulf %10, %15 : vector<3x128xf32>
    %17 = vector.extract_strided_slice %3 {offsets = [1, 0, 0], sizes = [1, 3, 1], strides = [1, 1, 1]} : vector<11x3x1xf32> to vector<1x3x1xf32>
    %18 = vector.shape_cast %17 : vector<1x3x1xf32> to vector<3x1xf32>
    %19 = vector.broadcast %18 : vector<3x1xf32> to vector<3x128xf32>
    %20 = arith.mulf %19, %8 : vector<3x128xf32>
    %21 = arith.addf %16, %20 : vector<3x128xf32>
    %22 = vector.broadcast %14 : vector<3x1xf32> to vector<3x128xf32>
    %23 = arith.mulf %10, %22 : vector<3x128xf32>
    %24 = vector.extract_strided_slice %4 {offsets = [1, 0, 0], sizes = [1, 3, 1], strides = [1, 1, 1]} : vector<10x3x1xf32> to vector<1x3x1xf32>
    %25 = vector.shape_cast %24 : vector<1x3x1xf32> to vector<3x1xf32>
    %26 = vector.broadcast %25 : vector<3x1xf32> to vector<3x128xf32>
    %27 = arith.mulf %26, %8 : vector<3x128xf32>
    %28 = arith.addf %23, %27 : vector<3x128xf32>
    %29 = arith.mulf %8, %8 : vector<3x128xf32>
    %30 = arith.mulf %10, %21 : vector<3x128xf32>
    %31 = vector.extract_strided_slice %3 {offsets = [2, 0, 0], sizes = [1, 3, 1], strides = [1, 1, 1]} : vector<11x3x1xf32> to vector<1x3x1xf32>
    %32 = vector.shape_cast %31 : vector<1x3x1xf32> to vector<3x1xf32>
    %33 = vector.broadcast %32 : vector<3x1xf32> to vector<3x128xf32>
    %34 = arith.mulf %33, %29 : vector<3x128xf32>
    %35 = arith.addf %30, %34 : vector<3x128xf32>
    %36 = arith.mulf %10, %28 : vector<3x128xf32>
    %37 = vector.extract_strided_slice %4 {offsets = [2, 0, 0], sizes = [1, 3, 1], strides = [1, 1, 1]} : vector<10x3x1xf32> to vector<1x3x1xf32>
    %38 = vector.shape_cast %37 : vector<1x3x1xf32> to vector<3x1xf32>
    %39 = vector.broadcast %38 : vector<3x1xf32> to vector<3x128xf32>
    %40 = arith.mulf %39, %29 : vector<3x128xf32>
    %41 = arith.addf %36, %40 : vector<3x128xf32>
    %42 = arith.mulf %29, %8 : vector<3x128xf32>
    %43 = arith.mulf %10, %35 : vector<3x128xf32>
    %44 = vector.extract_strided_slice %3 {offsets = [3, 0, 0], sizes = [1, 3, 1], strides = [1, 1, 1]} : vector<11x3x1xf32> to vector<1x3x1xf32>
    %45 = vector.shape_cast %44 : vector<1x3x1xf32> to vector<3x1xf32>
    %46 = vector.broadcast %45 : vector<3x1xf32> to vector<3x128xf32>
    %47 = arith.mulf %46, %42 : vector<3x128xf32>
    %48 = arith.addf %43, %47 : vector<3x128xf32>
    %49 = arith.mulf %10, %41 : vector<3x128xf32>
    %50 = vector.extract_strided_slice %4 {offsets = [3, 0, 0], sizes = [1, 3, 1], strides = [1, 1, 1]} : vector<10x3x1xf32> to vector<1x3x1xf32>
    %51 = vector.shape_cast %50 : vector<1x3x1xf32> to vector<3x1xf32>
    %52 = vector.broadcast %51 : vector<3x1xf32> to vector<3x128xf32>
    %53 = arith.mulf %52, %42 : vector<3x128xf32>
    %54 = arith.addf %49, %53 : vector<3x128xf32>
    %55 = arith.mulf %42, %8 : vector<3x128xf32>
    %56 = arith.mulf %10, %48 : vector<3x128xf32>
    %57 = vector.extract_strided_slice %3 {offsets = [4, 0, 0], sizes = [1, 3, 1], strides = [1, 1, 1]} : vector<11x3x1xf32> to vector<1x3x1xf32>
    %58 = vector.shape_cast %57 : vector<1x3x1xf32> to vector<3x1xf32>
    %59 = vector.broadcast %58 : vector<3x1xf32> to vector<3x128xf32>
    %60 = arith.mulf %59, %55 : vector<3x128xf32>
    %61 = arith.addf %56, %60 : vector<3x128xf32>
    %62 = arith.mulf %10, %54 : vector<3x128xf32>
    %63 = vector.extract_strided_slice %4 {offsets = [4, 0, 0], sizes = [1, 3, 1], strides = [1, 1, 1]} : vector<10x3x1xf32> to vector<1x3x1xf32>
    %64 = vector.shape_cast %63 : vector<1x3x1xf32> to vector<3x1xf32>
    %65 = vector.broadcast %64 : vector<3x1xf32> to vector<3x128xf32>
    %66 = arith.mulf %65, %55 : vector<3x128xf32>
    %67 = arith.addf %62, %66 : vector<3x128xf32>
    %68 = arith.mulf %55, %8 : vector<3x128xf32>
    %69 = arith.mulf %10, %61 : vector<3x128xf32>
    %70 = vector.extract_strided_slice %3 {offsets = [5, 0, 0], sizes = [1, 3, 1], strides = [1, 1, 1]} : vector<11x3x1xf32> to vector<1x3x1xf32>
    %71 = vector.shape_cast %70 : vector<1x3x1xf32> to vector<3x1xf32>
    %72 = vector.broadcast %71 : vector<3x1xf32> to vector<3x128xf32>
    %73 = arith.mulf %72, %68 : vector<3x128xf32>
    %74 = arith.addf %69, %73 : vector<3x128xf32>
    %75 = arith.mulf %10, %67 : vector<3x128xf32>
    %76 = vector.extract_strided_slice %4 {offsets = [5, 0, 0], sizes = [1, 3, 1], strides = [1, 1, 1]} : vector<10x3x1xf32> to vector<1x3x1xf32>
    %77 = vector.shape_cast %76 : vector<1x3x1xf32> to vector<3x1xf32>
    %78 = vector.broadcast %77 : vector<3x1xf32> to vector<3x128xf32>
    %79 = arith.mulf %78, %68 : vector<3x128xf32>
    %80 = arith.addf %75, %79 : vector<3x128xf32>
    %81 = arith.mulf %68, %8 : vector<3x128xf32>
    %82 = arith.mulf %10, %74 : vector<3x128xf32>
    %83 = vector.extract_strided_slice %3 {offsets = [6, 0, 0], sizes = [1, 3, 1], strides = [1, 1, 1]} : vector<11x3x1xf32> to vector<1x3x1xf32>
    %84 = vector.shape_cast %83 : vector<1x3x1xf32> to vector<3x1xf32>
    %85 = vector.broadcast %84 : vector<3x1xf32> to vector<3x128xf32>
    %86 = arith.mulf %85, %81 : vector<3x128xf32>
    %87 = arith.addf %82, %86 : vector<3x128xf32>
    %88 = arith.mulf %10, %80 : vector<3x128xf32>
    %89 = vector.extract_strided_slice %4 {offsets = [6, 0, 0], sizes = [1, 3, 1], strides = [1, 1, 1]} : vector<10x3x1xf32> to vector<1x3x1xf32>
    %90 = vector.shape_cast %89 : vector<1x3x1xf32> to vector<3x1xf32>
    %91 = vector.broadcast %90 : vector<3x1xf32> to vector<3x128xf32>
    %92 = arith.mulf %91, %81 : vector<3x128xf32>
    %93 = arith.addf %88, %92 : vector<3x128xf32>
    %94 = arith.mulf %81, %8 : vector<3x128xf32>
    %95 = arith.mulf %10, %87 : vector<3x128xf32>
    %96 = vector.extract_strided_slice %3 {offsets = [7, 0, 0], sizes = [1, 3, 1], strides = [1, 1, 1]} : vector<11x3x1xf32> to vector<1x3x1xf32>
    %97 = vector.shape_cast %96 : vector<1x3x1xf32> to vector<3x1xf32>
    %98 = vector.broadcast %97 : vector<3x1xf32> to vector<3x128xf32>
    %99 = arith.mulf %98, %94 : vector<3x128xf32>
    %100 = arith.addf %95, %99 : vector<3x128xf32>
    %101 = arith.mulf %10, %93 : vector<3x128xf32>
    %102 = vector.extract_strided_slice %4 {offsets = [7, 0, 0], sizes = [1, 3, 1], strides = [1, 1, 1]} : vector<10x3x1xf32> to vector<1x3x1xf32>
    %103 = vector.shape_cast %102 : vector<1x3x1xf32> to vector<3x1xf32>
    %104 = vector.broadcast %103 : vector<3x1xf32> to vector<3x128xf32>
    %105 = arith.mulf %104, %94 : vector<3x128xf32>
    %106 = arith.addf %101, %105 : vector<3x128xf32>
    %107 = arith.mulf %94, %8 : vector<3x128xf32>
    %108 = arith.mulf %10, %100 : vector<3x128xf32>
    %109 = vector.extract_strided_slice %3 {offsets = [8, 0, 0], sizes = [1, 3, 1], strides = [1, 1, 1]} : vector<11x3x1xf32> to vector<1x3x1xf32>
    %110 = vector.shape_cast %109 : vector<1x3x1xf32> to vector<3x1xf32>
    %111 = vector.broadcast %110 : vector<3x1xf32> to vector<3x128xf32>
    %112 = arith.mulf %111, %107 : vector<3x128xf32>
    %113 = arith.addf %108, %112 : vector<3x128xf32>
    %114 = arith.mulf %10, %106 : vector<3x128xf32>
    %115 = vector.extract_strided_slice %4 {offsets = [8, 0, 0], sizes = [1, 3, 1], strides = [1, 1, 1]} : vector<10x3x1xf32> to vector<1x3x1xf32>
    %116 = vector.shape_cast %115 : vector<1x3x1xf32> to vector<3x1xf32>
    %117 = vector.broadcast %116 : vector<3x1xf32> to vector<3x128xf32>
    %118 = arith.mulf %117, %107 : vector<3x128xf32>
    %119 = arith.addf %114, %118 : vector<3x128xf32>
    %120 = arith.mulf %107, %8 : vector<3x128xf32>
    %121 = arith.mulf %10, %113 : vector<3x128xf32>
    %122 = vector.extract_strided_slice %3 {offsets = [9, 0, 0], sizes = [1, 3, 1], strides = [1, 1, 1]} : vector<11x3x1xf32> to vector<1x3x1xf32>
    %123 = vector.shape_cast %122 : vector<1x3x1xf32> to vector<3x1xf32>
    %124 = vector.broadcast %123 : vector<3x1xf32> to vector<3x128xf32>
    %125 = arith.mulf %124, %120 : vector<3x128xf32>
    %126 = arith.addf %121, %125 : vector<3x128xf32>
    %127 = arith.mulf %10, %119 : vector<3x128xf32>
    %128 = vector.extract_strided_slice %4 {offsets = [9, 0, 0], sizes = [1, 3, 1], strides = [1, 1, 1]} : vector<10x3x1xf32> to vector<1x3x1xf32>
    %129 = vector.shape_cast %128 : vector<1x3x1xf32> to vector<3x1xf32>
    %130 = vector.broadcast %129 : vector<3x1xf32> to vector<3x128xf32>
    %131 = arith.mulf %130, %120 : vector<3x128xf32>
    %132 = arith.addf %127, %131 : vector<3x128xf32>
    %133 = arith.mulf %120, %8 : vector<3x128xf32>
    %134 = arith.mulf %10, %126 : vector<3x128xf32>
    %135 = vector.extract_strided_slice %3 {offsets = [10, 0, 0], sizes = [1, 3, 1], strides = [1, 1, 1]} : vector<11x3x1xf32> to vector<1x3x1xf32>
    %136 = vector.shape_cast %135 : vector<1x3x1xf32> to vector<3x1xf32>
    %137 = vector.broadcast %136 : vector<3x1xf32> to vector<3x128xf32>
    %138 = arith.mulf %137, %133 : vector<3x128xf32>
    %139 = arith.addf %134, %138 : vector<3x128xf32>
    %c0_11 = arith.constant 0 : index
    %c0_12 = arith.constant 0 : index
    %140 = vector.load %arg6[%c0_11, %c0_12] : memref<3x128xf32, #tpu.memory_space<vmem>>, vector<3x128xf32>
    tpu.vector_store %arg6[%c0_11, %c0_12], %139 {strides = array<i32>} : memref<3x128xf32, #tpu.memory_space<vmem>>, vector<3x128xf32>,
    %141 = math.log %132 : vector<3x128xf32>
    %c0_13 = arith.constant 0 : index
    %c0_14 = arith.constant 0 : index
    %142 = vector.load %arg7[%c0_13, %c0_14] : memref<3x128xf32, #tpu.memory_space<vmem>>, vector<3x128xf32>
    tpu.vector_store %arg7[%c0_13, %c0_14], %141 {strides = array<i32>} : memref<3x128xf32, #tpu.memory_space<vmem>>, vector<3x128xf32>,
    return
  }
  func.func @transform_0(%arg0: i32) -> (i32, i32) {
    %c0_i32 = arith.constant 0 : i32
    %c0_i32_0 = arith.constant 0 : i32
    return %c0_i32, %arg0 : i32, i32
  }
  func.func @transform_1(%arg0: i32) -> (i32, i32) {
    %c0_i32 = arith.constant 0 : i32
    %c0_i32_0 = arith.constant 0 : i32
    %c0_i32_1 = arith.constant 0 : i32
    return %c0_i32, %c0_i32_0 : i32, i32
  }
  func.func @transform_2(%arg0: i32) -> (i32, i32) {
    %c0_i32 = arith.constant 0 : i32
    %c0_i32_0 = arith.constant 0 : i32
    %c0_i32_1 = arith.constant 0 : i32
    return %c0_i32, %c0_i32_0 : i32, i32
  }
  func.func @transform_3(%arg0: i32) -> (i32, i32, i32) {
    %c0_i32 = arith.constant 0 : i32
    %c0_i32_0 = arith.constant 0 : i32
    %c0_i32_1 = arith.constant 0 : i32
    %c0_i32_2 = arith.constant 0 : i32
    return %c0_i32, %c0_i32_0, %c0_i32_1 : i32, i32, i32
  }
  func.func @transform_4(%arg0: i32) -> (i32, i32, i32) {
    %c0_i32 = arith.constant 0 : i32
    %c0_i32_0 = arith.constant 0 : i32
    %c0_i32_1 = arith.constant 0 : i32
    %c0_i32_2 = arith.constant 0 : i32
    return %c0_i32, %c0_i32_0, %c0_i32_1 : i32, i32, i32
  }
  func.func @transform_5(%arg0: i32) -> (i32, i32) {
    %c0_i32 = arith.constant 0 : i32
    %c0_i32_0 = arith.constant 0 : i32
    return %c0_i32, %arg0 : i32, i32
  }
  func.func @transform_6(%arg0: i32) -> (i32, i32) {
    %c0_i32 = arith.constant 0 : i32
    %c0_i32_0 = arith.constant 0 : i32
    return %c0_i32, %arg0 : i32, i32
  }
}

</mosaic_0001>

<llo_original>
// kernel: tpu_custom_call.1
$region0: #{tpu_custom_call.1}
  #allocation0 [shape = 'u32[]', space=smem, size = 0x4, offset = 0x4, fixed_abs, tag = 'smem constant byte address 0x4 - core index']
  #allocation1 [shape = 'u32[144,128]{1,0:T(1,128)}', space=vmem, size = 0x12000, scoped, tag = 'internal scratch']
  %s0 = inlined_call_operand.vmem [shape: f32[3,128], index: 0, kind: input, shape index: {}]
  %s1 = inlined_call_operand.vmem [shape: f32[3,1], index: 1, kind: input, shape index: {}]
  %s2 = inlined_call_operand.vmem [shape: f32[3,1], index: 2, kind: input, shape index: {}]
  %s3 = inlined_call_operand.vmem [shape: f32[11,3,1], index: 3, kind: input, shape index: {}]
  %s4 = inlined_call_operand.vmem [shape: f32[10,3,1], index: 4, kind: input, shape index: {}]
  %s5 = inlined_call_operand.hbm [shape: f32[3,128], index: 5, kind: output, shape index: {0}]
  %s6 = inlined_call_operand.hbm [shape: f32[3,128], index: 6, kind: output, shape index: {1}]
  %7 = xla_tuple %s5, %s6
  %s8 = sld [smem:[#allocation0]]
  $region38: #{tpu_custom_call.1} parent=0
    _
  %s10 = ssub.s32 1, %s8
  %s11 = scalar_select 0, %s10, %s8
  $region1: #{tpu_custom_call.1} parent=0
    #allocation2 [shape = 'u8[2048]{0}', space=vmem, size = 0x800, scoped, tag = 'output window, operand 0, single buffered']
    #allocation3 [shape = 's32[1]{0}', space=sflag, size = 0x4, scoped, tag = 'scoped memory for tpu_custom_call.1']
    #allocation4 [shape = 'u8[2048]{0}', space=vmem, size = 0x800, scoped, tag = 'output window, operand 1, single buffered']
    #allocation5 [shape = 's32[1]{0}', space=sflag, size = 0x4, scoped, tag = 'scoped memory for tpu_custom_call.1']
    %12 = vsyncpa [#allocation3], 0
    %13 = vsyncpa [#allocation5], 0
    // Predicated region
    $region2: #{tpu_custom_call.1} parent=1 // pred_check
      _
    $region3: #{tpu_custom_call.1} parent=1 // pred_check_branch
      %15 = sbr.rel (0) target = $region5
    $region4: #{tpu_custom_call.1} parent=1 // pred_region
      _
    $region5: #{tpu_custom_call.1} parent=1 // pred_fallthru
      _
    // Predicated region
    $region6: #{tpu_custom_call.1} parent=1 // pred_check
      _
    $region7: #{tpu_custom_call.1} parent=1 // pred_check_branch
      %17 = sbr.rel (0) target = $region9
    $region8: #{tpu_custom_call.1} parent=1 // pred_region
      _
    $region9: #{tpu_custom_call.1} parent=1 // pred_fallthru
      _
    // Predicated region
    $region10: #{tpu_custom_call.1} parent=1 // pred_check
      _
    $region11: #{tpu_custom_call.1} parent=1 // pred_check_branch
      %19 = sbr.rel (0) target = $region13
    $region12: #{tpu_custom_call.1} parent=1 // pred_region
      _
    $region13: #{tpu_custom_call.1} parent=1 // pred_fallthru
      _
    // Predicated region
    $region14: #{tpu_custom_call.1} parent=1 // pred_check
      _
    $region15: #{tpu_custom_call.1} parent=1 // pred_check_branch
      %21 = sbr.rel (0) target = $region17
    $region16: #{tpu_custom_call.1} parent=1 // pred_region
      _
    $region17: #{tpu_custom_call.1} parent=1 // pred_fallthru
      _
    // Predicated region
    $region18: #{tpu_custom_call.1} parent=1 // pred_check
      _
    $region19: #{tpu_custom_call.1} parent=1 // pred_check_branch
      %23 = sbr.rel (0) target = $region21
    $region20: #{tpu_custom_call.1} parent=1 // pred_region
      _
    $region21: #{tpu_custom_call.1} parent=1 // pred_fallthru
      _
    %v24 = vld [vmem:[%s0] sm:$0x7]
    %v25 = vld [vmem:[%s1] sm:$0x7]
    %v26 = vld [vmem:[%s2] sm:$0x7]
    %v27 = vld [vmem:[%s3] sm:$0x7]
    %v28 = vld [vmem:[%s3 + $0x4] sm:$0x7]
    %v29 = vld [vmem:[%s3 + $0x8] sm:$0x7]
    %v30 = vld [vmem:[%s3 + $0xc] sm:$0x7]
    %v31 = vld [vmem:[%s3 + $0x10] sm:$0x7]
    %v32 = vld [vmem:[%s3 + $0x14] sm:$0x7]
    %v33 = vld [vmem:[%s3 + $0x18] sm:$0x7]
    %v34 = vld [vmem:[%s3 + $0x1c] sm:$0x7]
    %v35 = vld [vmem:[%s3 + $0x20] sm:$0x7]
    %v36 = vld [vmem:[%s3 + $0x24] sm:$0x7]
    %v37 = vld [vmem:[%s3 + $0x28] sm:$0x7]
    %v38 = vld [vmem:[%s4] sm:$0x7]
    %v39 = vld [vmem:[%s4 + $0x4] sm:$0x7]
    %v40 = vld [vmem:[%s4 + $0x8] sm:$0x7]
    %v41 = vld [vmem:[%s4 + $0xc] sm:$0x7]
    %v42 = vld [vmem:[%s4 + $0x10] sm:$0x7]
    %v43 = vld [vmem:[%s4 + $0x14] sm:$0x7]
    %v44 = vld [vmem:[%s4 + $0x18] sm:$0x7]
    %v45 = vld [vmem:[%s4 + $0x1c] sm:$0x7]
    %v46 = vld [vmem:[%s4 + $0x20] sm:$0x7]
    %v47 = vld [vmem:[%s4 + $0x24] sm:$0x7]
    %49 = vset.pattern.permute.xlu0 0
    %50 = vperm.xlu0 %49, %v25
    %v51 = vpop.permute.xlu0 %50
    %v53 = vsub.f32 %v24, %v51
    %55 = vset.pattern.permute.xlu0 0
    %56 = vperm.xlu0 %55, %v26
    %v57 = vpop.permute.xlu0 %56
    %v59 = vmul.f32 %v53, %v57
    %v60 = vsub.f32 1.0, %v59
    %62 = vset.pattern.permute.xlu0 0
    %63 = vperm.xlu0 %62, %v27
    %v64 = vpop.permute.xlu0 %63
    %v66 = vmul.f32 %v60, %v64
    %68 = vset.pattern.permute.xlu0 0
    %69 = vperm.xlu0 %68, %v28
    %v70 = vpop.permute.xlu0 %69
    %v72 = vmul.f32 %v70, %v59
    %v73 = vadd.f32 %v66, %v72
    %75 = vset.pattern.permute.xlu0 0
    %76 = vperm.xlu0 %75, %v38
    %v77 = vpop.permute.xlu0 %76
    %v79 = vmul.f32 %v60, %v77
    %81 = vset.pattern.permute.xlu0 0
    %82 = vperm.xlu0 %81, %v39
    %v83 = vpop.permute.xlu0 %82
    %v85 = vmul.f32 %v83, %v59
    %v86 = vadd.f32 %v79, %v85
    %v87 = vmul.f32 %v59, %v59
    %v88 = vmul.f32 %v60, %v73
    %90 = vset.pattern.permute.xlu0 0
    %91 = vperm.xlu0 %90, %v29
    %v92 = vpop.permute.xlu0 %91
    %v94 = vmul.f32 %v92, %v87
    %v95 = vadd.f32 %v88, %v94
    %v96 = vmul.f32 %v60, %v86
    %98 = vset.pattern.permute.xlu0 0
    %99 = vperm.xlu0 %98, %v40
    %v100 = vpop.permute.xlu0 %99
    %v102 = vmul.f32 %v100, %v87
    %v103 = vadd.f32 %v96, %v102
    %v104 = vmul.f32 %v87, %v59
    %v105 = vmul.f32 %v60, %v95
    %107 = vset.pattern.permute.xlu0 0
    %108 = vperm.xlu0 %107, %v30
    %v109 = vpop.permute.xlu0 %108
    %v111 = vmul.f32 %v109, %v104
    %v112 = vadd.f32 %v105, %v111
    %v113 = vmul.f32 %v60, %v103
    %115 = vset.pattern.permute.xlu0 0
    %116 = vperm.xlu0 %115, %v41
    %v117 = vpop.permute.xlu0 %116
    %v119 = vmul.f32 %v117, %v104
    %v120 = vadd.f32 %v113, %v119
    %v121 = vmul.f32 %v104, %v59
    %v122 = vmul.f32 %v60, %v112
    %124 = vset.pattern.permute.xlu0 0
    %125 = vperm.xlu0 %124, %v31
    %v126 = vpop.permute.xlu0 %125
    %v128 = vmul.f32 %v126, %v121
    %v129 = vadd.f32 %v122, %v128
    %v130 = vmul.f32 %v60, %v120
    %132 = vset.pattern.permute.xlu0 0
    %133 = vperm.xlu0 %132, %v42
    %v134 = vpop.permute.xlu0 %133
    %v136 = vmul.f32 %v134, %v121
    %v137 = vadd.f32 %v130, %v136
    %v138 = vmul.f32 %v121, %v59
    %v139 = vmul.f32 %v60, %v129
    %141 = vset.pattern.permute.xlu0 0
    %142 = vperm.xlu0 %141, %v32
    %v143 = vpop.permute.xlu0 %142
    %v145 = vmul.f32 %v143, %v138
    %v146 = vadd.f32 %v139, %v145
    %v147 = vmul.f32 %v60, %v137
    %149 = vset.pattern.permute.xlu0 0
    %150 = vperm.xlu0 %149, %v43
    %v151 = vpop.permute.xlu0 %150
    %v153 = vmul.f32 %v151, %v138
    %v154 = vadd.f32 %v147, %v153
    %v155 = vmul.f32 %v138, %v59
    %v156 = vmul.f32 %v60, %v146
    %158 = vset.pattern.permute.xlu0 0
    %159 = vperm.xlu0 %158, %v33
    %v160 = vpop.permute.xlu0 %159
    %v162 = vmul.f32 %v160, %v155
    %v163 = vadd.f32 %v156, %v162
    %v164 = vmul.f32 %v60, %v154
    %166 = vset.pattern.permute.xlu0 0
    %167 = vperm.xlu0 %166, %v44
    %v168 = vpop.permute.xlu0 %167
    %v170 = vmul.f32 %v168, %v155
    %v171 = vadd.f32 %v164, %v170
    %v172 = vmul.f32 %v155, %v59
    %v173 = vmul.f32 %v60, %v163
    %175 = vset.pattern.permute.xlu0 0
    %176 = vperm.xlu0 %175, %v34
    %v177 = vpop.permute.xlu0 %176
    %v179 = vmul.f32 %v177, %v172
    %v180 = vadd.f32 %v173, %v179
    %v181 = vmul.f32 %v60, %v171
    %183 = vset.pattern.permute.xlu0 0
    %184 = vperm.xlu0 %183, %v45
    %v185 = vpop.permute.xlu0 %184
    %v187 = vmul.f32 %v185, %v172
    %v188 = vadd.f32 %v181, %v187
    %v189 = vmul.f32 %v172, %v59
    %v190 = vmul.f32 %v60, %v180
    %192 = vset.pattern.permute.xlu0 0
    %193 = vperm.xlu0 %192, %v35
    %v194 = vpop.permute.xlu0 %193
    %v196 = vmul.f32 %v194, %v189
    %v197 = vadd.f32 %v190, %v196
    %v198 = vmul.f32 %v60, %v188
    %200 = vset.pattern.permute.xlu0 0
    %201 = vperm.xlu0 %200, %v46
    %v202 = vpop.permute.xlu0 %201
    %v204 = vmul.f32 %v202, %v189
    %v205 = vadd.f32 %v198, %v204
    %v206 = vmul.f32 %v189, %v59
    %v207 = vmul.f32 %v60, %v197
    %209 = vset.pattern.permute.xlu0 0
    %210 = vperm.xlu0 %209, %v36
    %v211 = vpop.permute.xlu0 %210
    %v213 = vmul.f32 %v211, %v206
    %v214 = vadd.f32 %v207, %v213
    %v215 = vmul.f32 %v60, %v205
    %217 = vset.pattern.permute.xlu0 0
    %218 = vperm.xlu0 %217, %v47
    %v219 = vpop.permute.xlu0 %218
    %v221 = vmul.f32 %v219, %v206
    %v222 = vadd.f32 %v215, %v221
    %v223 = vmul.f32 %v206, %v59
    %v224 = vmul.f32 %v60, %v214
    %226 = vset.pattern.permute.xlu0 0
    %227 = vperm.xlu0 %226, %v37
    %v228 = vpop.permute.xlu0 %227
    %v230 = vmul.f32 %v228, %v223
    %v231 = vadd.f32 %v224, %v230
    %232 = vst [vmem:[#allocation2] sm:$0x7] %v231
    %v233 = vlog2.pop %v222
    %v234 = vmul.f32 %v233, 0.6931472
    %235 = vst [vmem:[#allocation4] sm:$0x7] %v234
    // Predicated region
    $region22: #{tpu_custom_call.1} parent=1 // pred_check
      _
    $region23: #{tpu_custom_call.1} parent=1 // pred_check_branch
      %237 = sbr.rel (0) target = $region25
    $region24: #{tpu_custom_call.1} parent=1 // pred_region
      %s239 = ssub.s32 64, 64
      %240 = vsyncadd [#allocation3], %s239
      %s242 = sshll.u32 [#allocation2], 4
      %s243 = int_to_ptr.vmem [resolvable:$true] %s242
      %245 = dma.vmem_to_hbm [thread:$0]  %s243, 64, %s5, [#allocation3]
    $region25: #{tpu_custom_call.1} parent=1 // pred_fallthru
      _
    // Predicated region
    $region26: #{tpu_custom_call.1} parent=1 // pred_check
      _
    $region27: #{tpu_custom_call.1} parent=1 // pred_check_branch
      %247 = sbr.rel (0) target = $region29
    $region28: #{tpu_custom_call.1} parent=1 // pred_region
      %s249 = ssub.s32 64, 64
      %250 = vsyncadd [#allocation5], %s249
      %s252 = sshll.u32 [#allocation4], 4
      %s253 = int_to_ptr.vmem [resolvable:$true] %s252
      %255 = dma.vmem_to_hbm [thread:$0]  %s253, 64, %s6, [#allocation5]
    $region29: #{tpu_custom_call.1} parent=1 // pred_fallthru
      _
    // Predicated region
    $region30: #{tpu_custom_call.1} parent=1 // pred_check
      _
    $region31: #{tpu_custom_call.1} parent=1 // pred_check_branch
      %257 = sbr.rel (0) target = $region33
    $region32: #{tpu_custom_call.1} parent=1 // pred_region
      %258 = dma.done [#allocation3], 64
    $region33: #{tpu_custom_call.1} parent=1 // pred_fallthru
      _
    // Predicated region
    $region34: #{tpu_custom_call.1} parent=1 // pred_check
      _
    $region35: #{tpu_custom_call.1} parent=1 // pred_check_branch
      %260 = sbr.rel (0) target = $region37
    $region36: #{tpu_custom_call.1} parent=1 // pred_region
      %261 = dma.done [#allocation5], 64
    $region37: #{tpu_custom_call.1} parent=1 // pred_fallthru
      _
    %262 = vsyncpa [#allocation3], 1
    %263 = vsyncpa [#allocation5], 1

</llo_original>
